<compile_context>
chip_gen: v6e
topology: v6e:2x2x1
jax: 0.10.0
libtpu: 0.0.40
codegen_flags: <defaults>
</compile_context>

<pallas_src>
import jax
import jax.numpy as jnp
from jax.experimental import pallas as pl
from jax.experimental.pallas import tpu as pltpu


def _attention_kernel(enc_ref, st_ref, mask_ref, wh_ref, ws_ref, wsb_ref, v_ref,
                      ctx_ref, aw_ref):
    # Block shapes (one batch element per grid step):
    #   enc_ref : (1, S, D)   encoder_output slab
    #   st_ref  : (1, 1, D)   concat(h_dec, c_dec) for this batch element
    #   mask_ref: (1, S, 1)   padding mask
    #   wh_ref  : (D, D)      Wh^T        (resident across grid steps)
    #   ws_ref  : (D, D)      Ws^T
    #   wsb_ref : (1, D)      Ws bias
    #   v_ref   : (1, D)      v weight row
    #   ctx_ref : (1, 1, D)   context vector out
    #   aw_ref  : (1, S, 1)   attention weights out
    S = enc_ref.shape[1]
    D = enc_ref.shape[2]

    enc = enc_ref[0]                                     # (S, D)
    st = st_ref[0]                                       # (1, D)

    # Linear layers on the MXU (f32 accumulation).
    ef = jnp.dot(enc, wh_ref[...], preferred_element_type=jnp.float32)      # (S, D)
    df = jnp.dot(st, ws_ref[...], preferred_element_type=jnp.float32)       # (1, D)
    df = df + wsb_ref[...]                                                   # (1, D)

    att = jnp.tanh(ef + df)                              # (S, D)  (EUP tanh)

    # v-projection as a lane reduction: (S, D) * (1, D) summed over lanes.
    score = jnp.sum(att * v_ref[...], axis=-1, keepdims=True)               # (S, 1)

    # Softmax over the sequence axis.
    m = jnp.max(score, axis=0, keepdims=True)            # (1, 1)
    e = jnp.exp(score - m)                               # (S, 1)
    w = e / jnp.sum(e, axis=0, keepdims=True)            # (S, 1)

    # Mask padding positions and renormalize.
    w = w * mask_ref[0]                                  # (S, 1)
    w = w / jnp.sum(w, axis=0, keepdims=True)            # (S, 1)

    # Context vector = sum_s w[s] * enc[s]  -> lane-dense (1, D) output.
    ctx = jnp.sum(w * enc, axis=0, keepdims=True)        # (1, D)

    ctx_ref[...] = ctx.reshape(1, 1, D).astype(ctx_ref.dtype)
    aw_ref[...] = w.reshape(1, S, 1).astype(aw_ref.dtype)


def attention_forward(decoder_states, encoder_output, x_padding_masks,
                      Wh, Ws, Ws_b, v_w):
    """JAX/Pallas equivalent of Attention.forward.

    Args:
        decoder_states: (h_dec, c_dec), each (1, B, H).
        encoder_output: (B, S, 2H).
        x_padding_masks: (B, S).
        Wh: (2H, 2H) torch-layout (out, in), no bias.
        Ws: (2H, 2H) torch-layout, Ws_b: (2H,) bias.
        v_w: (1, 2H) torch-layout, no bias.

    Returns:
        context_vector: (B, 2H)
        attention_weights: (B, S)
    """
    h_dec, c_dec = decoder_states
    B, S, D = encoder_output.shape
    dtype = encoder_output.dtype

    # Wrapper-side layout plumbing (pure reshapes / transposes).
    s_t = jnp.concatenate([h_dec[0], c_dec[0]], axis=-1)        # (B, D)
    st3 = s_t.reshape(B, 1, D)
    mask3 = x_padding_masks.astype(dtype).reshape(B, S, 1)
    wh_t = Wh.T                                                 # (D, D)
    ws_t = Ws.T                                                 # (D, D)
    wsb = Ws_b.reshape(1, D)
    v_row = v_w.reshape(1, D)

    ctx3, aw3 = pl.pallas_call(
        _attention_kernel,
        out_shape=(
            jax.ShapeDtypeStruct((B, 1, D), dtype),
            jax.ShapeDtypeStruct((B, S, 1), dtype),
        ),
        grid=(B,),
        in_specs=[
            pl.BlockSpec((1, S, D), lambda b: (b, 0, 0)),   # encoder_output
            pl.BlockSpec((1, 1, D), lambda b: (b, 0, 0)),   # s_t
            pl.BlockSpec((1, S, 1), lambda b: (b, 0, 0)),   # padding mask
            pl.BlockSpec((D, D), lambda b: (0, 0)),         # Wh^T (resident)
            pl.BlockSpec((D, D), lambda b: (0, 0)),         # Ws^T (resident)
            pl.BlockSpec((1, D), lambda b: (0, 0)),         # Ws bias
            pl.BlockSpec((1, D), lambda b: (0, 0)),         # v row
        ],
        out_specs=(
            pl.BlockSpec((1, 1, D), lambda b: (b, 0, 0)),   # context
            pl.BlockSpec((1, S, 1), lambda b: (b, 0, 0)),   # attention weights
        ),
        compiler_params=pltpu.CompilerParams(
            dimension_semantics=("parallel",)),
    )(encoder_output, st3, mask3, wh_t, ws_t, wsb, v_row)

    return ctx3.reshape(B, D), aw3.reshape(B, S)


def _attention_ref(decoder_states, encoder_output, x_padding_masks,
                   Wh, Ws, Ws_b, v_w):
    """Pure-JAX reference mirroring the PyTorch code."""
    h_dec, c_dec = decoder_states
    s_t = jnp.concatenate([h_dec, c_dec], axis=2)               # (1, B, 2H)
    s_t = jnp.transpose(s_t, (1, 0, 2))                         # (B, 1, 2H)
    s_t = jnp.broadcast_to(s_t, encoder_output.shape)           # (B, S, 2H)
    hp = jax.lax.Precision.HIGHEST
    ef = jnp.dot(encoder_output, Wh.T, precision=hp)
    df = jnp.dot(s_t, Ws.T, precision=hp) + Ws_b
    score = jnp.dot(jnp.tanh(ef + df), v_w.T, precision=hp)     # (B, S, 1)
    aw = jax.nn.softmax(score, axis=1)[..., 0]                  # (B, S)
    aw = aw * x_padding_masks
    aw = aw / jnp.sum(aw, axis=1, keepdims=True)
    ctx = jnp.einsum('bs,bsd->bd', aw, encoder_output, precision=hp)
    return ctx, aw


if __name__ == "__main__":
    # Small deterministic shapes: hidden_units=64 so 2*hidden = 128 (lane-dense).
    batch, seq, hidden = 2, 8, 64
    D = 2 * hidden

    key = jax.random.PRNGKey(0)
    ks = jax.random.split(key, 8)
    Wh = jax.random.normal(ks[0], (D, D), jnp.float32) * 0.05
    Ws = jax.random.normal(ks[1], (D, D), jnp.float32) * 0.05
    Ws_b = jax.random.normal(ks[2], (D,), jnp.float32) * 0.05
    v_w = jax.random.normal(ks[3], (1, D), jnp.float32) * 0.05
    h_dec = jax.random.normal(ks[4], (1, batch, hidden), jnp.float32)
    c_dec = jax.random.normal(ks[5], (1, batch, hidden), jnp.float32)
    encoder_output = jax.random.normal(ks[6], (batch, seq, D), jnp.float32)

    # Padding masks: batch 0 fully valid, batch 1 has 5 valid positions.
    lengths = jnp.array([seq, 5])
    x_padding_masks = (jnp.arange(seq)[None, :] < lengths[:, None]).astype(jnp.float32)

    ctx, aw = attention_forward((h_dec, c_dec), encoder_output, x_padding_masks,
                                Wh, Ws, Ws_b, v_w)
    jax.block_until_ready((ctx, aw))

    ctx_ref, aw_ref = _attention_ref((h_dec, c_dec), encoder_output,
                                     x_padding_masks, Wh, Ws, Ws_b, v_w)

    assert ctx.shape == (batch, D) and aw.shape == (batch, seq)
    assert jnp.allclose(ctx, ctx_ref, rtol=2e-3, atol=2e-3)
    assert jnp.allclose(aw, aw_ref, rtol=2e-3, atol=2e-3)
    # Masked positions must carry zero weight; weights sum to one.
    assert jnp.allclose(jnp.sum(aw, axis=1), jnp.ones((batch,)), atol=1e-5)
    assert jnp.allclose(aw * (1.0 - x_padding_masks), 0.0, atol=1e-6)

    print("KERNEL_OK")
</pallas_src>

<mosaic_0001>
module attributes {stable_mosaic.version = 11 : i64} {
  func.func @_attention_kernel(%arg0: i32, %arg1: memref<1x8x128xf32, #tpu.memory_space<vmem>>, %arg2: memref<1x1x128xf32, #tpu.memory_space<vmem>>, %arg3: memref<1x8x1xf32, #tpu.memory_space<vmem>>, %arg4: memref<128x128xf32, #tpu.memory_space<vmem>>, %arg5: memref<128x128xf32, #tpu.memory_space<vmem>>, %arg6: memref<1x128xf32, #tpu.memory_space<vmem>>, %arg7: memref<1x128xf32, #tpu.memory_space<vmem>>, %arg8: memref<1x1x128xf32, #tpu.memory_space<vmem>>, %arg9: memref<1x8x1xf32, #tpu.memory_space<vmem>>) attributes {dimension_semantics = [#tpu.dimension_semantics<parallel>], iteration_bounds = array<i64: 2>, scalar_prefetch = 0 : i64, scratch_operands = 0 : i64, tpu.core_type = #tpu.core_type<tc>, window_params = [{transform_indices = @transform_0, window_bounds = array<i64: 1, 8, 128>}, {transform_indices = @transform_1, window_bounds = array<i64: 1, 1, 128>}, {transform_indices = @transform_2, window_bounds = array<i64: 1, 8, 1>}, {pipeline_mode = #tpu.pipeline_mode<synchronous>, transform_indices = @transform_3, window_bounds = array<i64: 128, 128>}, {pipeline_mode = #tpu.pipeline_mode<synchronous>, transform_indices = @transform_4, window_bounds = array<i64: 128, 128>}, {pipeline_mode = #tpu.pipeline_mode<synchronous>, transform_indices = @transform_5, window_bounds = array<i64: 1, 128>}, {pipeline_mode = #tpu.pipeline_mode<synchronous>, transform_indices = @transform_6, window_bounds = array<i64: 1, 128>}, {transform_indices = @transform_7, window_bounds = array<i64: 1, 1, 128>}, {transform_indices = @transform_8, window_bounds = array<i64: 1, 8, 1>}]} {
    %c0 = arith.constant 0 : index
    %c0_0 = arith.constant 0 : index
    %c0_1 = arith.constant 0 : index
    %0 = vector.load %arg1[%c0, %c0_0, %c0_1] : memref<1x8x128xf32, #tpu.memory_space<vmem>>, vector<1x8x128xf32>
    %1 = vector.shape_cast %0 : vector<1x8x128xf32> to vector<8x128xf32>
    %c0_2 = arith.constant 0 : index
    %c0_3 = arith.constant 0 : index
    %c0_4 = arith.constant 0 : index
    %2 = vector.load %arg2[%c0_2, %c0_3, %c0_4] : memref<1x1x128xf32, #tpu.memory_space<vmem>>, vector<1x1x128xf32>
    %3 = vector.shape_cast %2 : vector<1x1x128xf32> to vector<1x128xf32>
    %c0_5 = arith.constant 0 : index
    %c0_6 = arith.constant 0 : index
    %4 = vector.load %arg4[%c0_5, %c0_6] : memref<128x128xf32, #tpu.memory_space<vmem>>, vector<128x128xf32>
    %cst = arith.constant dense<0.000000e+00> : vector<8x128xf32>
    %5 = tpu.matmul %1, %4, %cst {dimension_numbers = #tpu.dot_dimension_numbers<[1], [0], [0], [1], [0, 0, 1, 1], [], []>} : vector<8x128xf32>, vector<128x128xf32>, vector<8x128xf32> -> vector<8x128xf32>
    %c0_7 = arith.constant 0 : index
    %c0_8 = arith.constant 0 : index
    %6 = vector.load %arg5[%c0_7, %c0_8] : memref<128x128xf32, #tpu.memory_space<vmem>>, vector<128x128xf32>
    %cst_9 = arith.constant dense<0.000000e+00> : vector<1x128xf32>
    %7 = tpu.matmul %3, %6, %cst_9 {dimension_numbers = #tpu.dot_dimension_numbers<[1], [0], [0], [1], [0, 0, 1, 1], [], []>} : vector<1x128xf32>, vector<128x128xf32>, vector<1x128xf32> -> vector<1x128xf32>
    %c0_10 = arith.constant 0 : index
    %c0_11 = arith.constant 0 : index
    %8 = vector.load %arg6[%c0_10, %c0_11] : memref<1x128xf32, #tpu.memory_space<vmem>>, vector<1x128xf32>
    %9 = arith.addf %7, %8 : vector<1x128xf32>
    %10 = vector.broadcast %9 : vector<1x128xf32> to vector<8x128xf32>
    %11 = arith.addf %5, %10 : vector<8x128xf32>
    %12 = math.tanh %11 : vector<8x128xf32>
    %c0_12 = arith.constant 0 : index
    %c0_13 = arith.constant 0 : index
    %13 = vector.load %arg7[%c0_12, %c0_13] : memref<1x128xf32, #tpu.memory_space<vmem>>, vector<1x128xf32>
    %14 = vector.broadcast %13 : vector<1x128xf32> to vector<8x128xf32>
    %15 = arith.mulf %12, %14 : vector<8x128xf32>
    %cst_14 = arith.constant dense<0.000000e+00> : vector<8xf32>
    %16 = vector.multi_reduction <add>, %15, %cst_14 [1] : vector<8x128xf32> to vector<8xf32>
    %17 = vector.shape_cast %16 : vector<8xf32> to vector<8x1xf32>
    %cst_15 = arith.constant dense<0xFF800000> : vector<1xf32>
    %18 = vector.multi_reduction <maximumf>, %17, %cst_15 [0] : vector<8x1xf32> to vector<1xf32>
    %19 = vector.shape_cast %18 : vector<1xf32> to vector<1x1xf32>
    %20 = vector.broadcast %19 : vector<1x1xf32> to vector<8x1xf32>
    %21 = arith.subf %17, %20 : vector<8x1xf32>
    %22 = math.exp %21 : vector<8x1xf32>
    %cst_16 = arith.constant dense<0.000000e+00> : vector<1xf32>
    %23 = vector.multi_reduction <add>, %22, %cst_16 [0] : vector<8x1xf32> to vector<1xf32>
    %24 = vector.shape_cast %23 : vector<1xf32> to vector<1x1xf32>
    %25 = vector.broadcast %24 : vector<1x1xf32> to vector<8x1xf32>
    %26 = arith.divf %22, %25 : vector<8x1xf32>
    %c0_17 = arith.constant 0 : index
    %c0_18 = arith.constant 0 : index
    %c0_19 = arith.constant 0 : index
    %27 = vector.load %arg3[%c0_17, %c0_18, %c0_19] : memref<1x8x1xf32, #tpu.memory_space<vmem>>, vector<1x8x1xf32>
    %28 = vector.shape_cast %27 : vector<1x8x1xf32> to vector<8x1xf32>
    %29 = arith.mulf %26, %28 : vector<8x1xf32>
    %cst_20 = arith.constant dense<0.000000e+00> : vector<1xf32>
    %30 = vector.multi_reduction <add>, %29, %cst_20 [0] : vector<8x1xf32> to vector<1xf32>
    %31 = vector.shape_cast %30 : vector<1xf32> to vector<1x1xf32>
    %32 = vector.broadcast %31 : vector<1x1xf32> to vector<8x1xf32>
    %33 = arith.divf %29, %32 : vector<8x1xf32>
    %34 = vector.broadcast %33 : vector<8x1xf32> to vector<8x128xf32>
    %35 = arith.mulf %34, %1 : vector<8x128xf32>
    %cst_21 = arith.constant dense<0.000000e+00> : vector<128xf32>
    %36 = vector.multi_reduction <add>, %35, %cst_21 [0] : vector<8x128xf32> to vector<128xf32>
    %37 = vector.shape_cast %36 : vector<128xf32> to vector<1x128xf32>
    %38 = vector.shape_cast %37 : vector<1x128xf32> to vector<1x1x128xf32>
    %c0_22 = arith.constant 0 : index
    %c0_23 = arith.constant 0 : index
    %c0_24 = arith.constant 0 : index
    %39 = vector.load %arg8[%c0_22, %c0_23, %c0_24] : memref<1x1x128xf32, #tpu.memory_space<vmem>>, vector<1x1x128xf32>
    tpu.vector_store %arg8[%c0_22, %c0_23, %c0_24], %38 {strides = array<i32>} : memref<1x1x128xf32, #tpu.memory_space<vmem>>, vector<1x1x128xf32>,
    %40 = vector.shape_cast %33 : vector<8x1xf32> to vector<1x8x1xf32>
    %c0_25 = arith.constant 0 : index
    %c0_26 = arith.constant 0 : index
    %c0_27 = arith.constant 0 : index
    %41 = vector.load %arg9[%c0_25, %c0_26, %c0_27] : memref<1x8x1xf32, #tpu.memory_space<vmem>>, vector<1x8x1xf32>
    tpu.vector_store %arg9[%c0_25, %c0_26, %c0_27], %40 {strides = array<i32>} : memref<1x8x1xf32, #tpu.memory_space<vmem>>, vector<1x8x1xf32>,
    return
  }
  func.func @transform_0(%arg0: i32) -> (i32, i32, i32) {
    %c0_i32 = arith.constant 0 : i32
    %c0_i32_0 = arith.constant 0 : i32
    %c0_i32_1 = arith.constant 0 : i32
    return %arg0, %c0_i32, %c0_i32_0 : i32, i32, i32
  }
  func.func @transform_1(%arg0: i32) -> (i32, i32, i32) {
    %c0_i32 = arith.constant 0 : i32
    %c0_i32_0 = arith.constant 0 : i32
    %c0_i32_1 = arith.constant 0 : i32
    return %arg0, %c0_i32, %c0_i32_0 : i32, i32, i32
  }
  func.func @transform_2(%arg0: i32) -> (i32, i32, i32) {
    %c0_i32 = arith.constant 0 : i32
    %c0_i32_0 = arith.constant 0 : i32
    %c0_i32_1 = arith.constant 0 : i32
    return %arg0, %c0_i32, %c0_i32_0 : i32, i32, i32
  }
  func.func @transform_3(%arg0: i32) -> (i32, i32) {
    %c0_i32 = arith.constant 0 : i32
    %c0_i32_0 = arith.constant 0 : i32
    %c0_i32_1 = arith.constant 0 : i32
    return %c0_i32, %c0_i32_0 : i32, i32
  }
  func.func @transform_4(%arg0: i32) -> (i32, i32) {
    %c0_i32 = arith.constant 0 : i32
    %c0_i32_0 = arith.constant 0 : i32
    %c0_i32_1 = arith.constant 0 : i32
    return %c0_i32, %c0_i32_0 : i32, i32
  }
  func.func @transform_5(%arg0: i32) -> (i32, i32) {
    %c0_i32 = arith.constant 0 : i32
    %c0_i32_0 = arith.constant 0 : i32
    %c0_i32_1 = arith.constant 0 : i32
    return %c0_i32, %c0_i32_0 : i32, i32
  }
  func.func @transform_6(%arg0: i32) -> (i32, i32) {
    %c0_i32 = arith.constant 0 : i32
    %c0_i32_0 = arith.constant 0 : i32
    %c0_i32_1 = arith.constant 0 : i32
    return %c0_i32, %c0_i32_0 : i32, i32
  }
  func.func @transform_7(%arg0: i32) -> (i32, i32, i32) {
    %c0_i32 = arith.constant 0 : i32
    %c0_i32_0 = arith.constant 0 : i32
    %c0_i32_1 = arith.constant 0 : i32
    return %arg0, %c0_i32, %c0_i32_0 : i32, i32, i32
  }
  func.func @transform_8(%arg0: i32) -> (i32, i32, i32) {
    %c0_i32 = arith.constant 0 : i32
    %c0_i32_0 = arith.constant 0 : i32
    %c0_i32_1 = arith.constant 0 : i32
    return %arg0, %c0_i32, %c0_i32_0 : i32, i32, i32
  }
}

</mosaic_0001>

<llo_original>
// kernel: tpu_custom_call.1
$region0: #{tpu_custom_call.1}
  #allocation0 [shape = 'u32[]', space=smem, size = 0x4, offset = 0x4, fixed_abs, tag = 'smem constant byte address 0x4 - core index']
  #allocation1 [shape = 'u32[144,128]{1,0:T(1,128)}', space=vmem, size = 0x12000, scoped, tag = 'internal scratch']
  %s0 = inlined_call_operand.vmem [shape: f32[2,8,128], index: 0, kind: input, shape index: {}]
  %s1 = inlined_call_operand.vmem [shape: f32[2,1,128], index: 1, kind: input, shape index: {}]
  %s2 = inlined_call_operand.vmem [shape: f32[2,8,1], index: 2, kind: input, shape index: {}]
  %s3 = inlined_call_operand.hbm [shape: f32[128,128], index: 3, kind: input, shape index: {}]
  %s4 = inlined_call_operand.hbm [shape: f32[128,128], index: 4, kind: input, shape index: {}]
  %s5 = inlined_call_operand.vmem [shape: f32[1,128], index: 5, kind: input, shape index: {}]
  %s6 = inlined_call_operand.vmem [shape: f32[1,128], index: 6, kind: input, shape index: {}]
  %s7 = inlined_call_operand.hbm [shape: f32[2,1,128], index: 7, kind: output, shape index: {0}]
  %s8 = inlined_call_operand.vmem [shape: f32[2,8,1], index: 8, kind: output, shape index: {1}]
  %9 = xla_tuple %s7, %s8
  %s10 = sld [smem:[#allocation0]]
  $region77: #{tpu_custom_call.1} parent=0
    _
  %s12 = ssub.s32 1, %s10
  %s13 = scalar_select 0, %s12, %s10
  $region1: #{tpu_custom_call.1} parent=0
    #allocation2 [shape = 'u8[65536]{0}', space=vmem, size = 0x10000, scoped, tag = 'input window, operand 3, single buffered']
    #allocation3 [shape = 's32[2]{0}', space=sflag, size = 0x8, scoped, tag = 'scoped memory for tpu_custom_call.1']
    #allocation4 [shape = 's32[2]{0}', space=sflag, size = 0x8, scoped, tag = 'scoped memory for tpu_custom_call.1']
    #allocation5 [shape = 'u8[65536]{0}', space=vmem, size = 0x10000, scoped, tag = 'input window, operand 4, single buffered']
    #allocation6 [shape = 's32[1]{0}', space=sflag, size = 0x4, scoped, tag = 'scoped memory for tpu_custom_call.1']
    #allocation7 [shape = 'u8[1024]{0}', space=vmem, size = 0x400, scoped, tag = 'output window, operand 0']
    %14 = vsyncpa [#allocation3], 0
    %15 = vsyncpa [#allocation6], 0
    %16 = vsyncpa [#allocation4], 0
    %s17 = scalar_lea.sflag [#allocation4], 1
    %18 = vsyncpa %s17, 0
    loop: start=0, step=1, limit=4
    $region2: #{tpu_custom_call.1} parent=1 // loop_pre_header
      _
    $region3: #{tpu_custom_call.1} parent=1 // loop_header
      %s20 = sphi 0, %s24
      %p21 = scmp.ge.s32.totalorder %s20, 4
      %s30 = sphi 0, %s32
      %s33 = sphi 0, %s30
      %s34 = sphi 0, %s33
      %s50 = sphi 0, %s34
      %s56 = sphi 0, %s58
      %s59 = sphi 0, %s56
      %s60 = sphi 0, %s59
      %s76 = sphi 0, %s60
      %s82 = sphi 0, %s84
      %s85 = sphi 0, %s82
      %s86 = sphi 0, %s85
      %s102 = sphi 0, %s86
      %s106 = sphi 0, %s106
      %s108 = sphi 0, %s106
      %s109 = sphi 0, %s108
      %s123 = sphi 0, %s109
      %s127 = sphi 0, %s127
      %s129 = sphi 0, %s127
      %s130 = sphi 0, %s129
      %s144 = sphi 0, %s130
      %s148 = sphi 0, %s148
      %s150 = sphi 0, %s148
      %s151 = sphi 0, %s150
      %s165 = sphi 0, %s151
      %s169 = sphi 0, %s169
      %s171 = sphi 0, %s169
      %s172 = sphi 0, %s171
      %s186 = sphi 0, %s172
      %s192 = sphi 0, %s194
      %s195 = sphi 0, %s192
      %s196 = sphi 0, %s195
      %s212 = sphi 0, %s196
      %s218 = sphi 0, %s220
      %s221 = sphi 0, %s218
      %s222 = sphi 0, %s221
      %s238 = sphi 0, %s222
    $region4: #{tpu_custom_call.1} parent=1 // loop_header_branch
      %23 = sbr.rel (%p21) target = $region8
    $region5: #{tpu_custom_call.1} parent=1 // loop_body
      %s25 = ssub.s32 %s20, 1
      %s26 = ssub.s32 %s20, 2
      %s27 = sadd.s32 %s20, 1
      %s28 = ssub.s32 %s20, %s27
      %p29 = scmp.eq.s32.totalorder %s28, 0
      %s31 = sadd.s32 %s30, 1
      %s32 = scalar_select %p29, %s30, %s31
      %p35 = pneg %p29
      %p36 = scmp.eq.s32.totalorder %s20, 1
      %p37 = por %p35, %p36
      %p38 = scmp.ne.s32.totalorder %s30, %s33
      %p39 = scmp.eq.s32.totalorder %s20, 0
      %p40 = por %p38, %p39
      %p41 = scmp.ne.s32.totalorder %s30, %s33
      %p42 = scmp.eq.s32.totalorder %s25, 1
      %p43 = por %p41, %p42
      %p44 = scmp.ne.s32.totalorder %s33, %s34
      %p45 = scmp.eq.s32.totalorder %s25, 0
      %p46 = por %p44, %p45
      %p47 = scmp.ne.s32.totalorder %s33, %s34
      %p48 = scmp.eq.s32.totalorder %s26, 1
      %p49 = por %p47, %p48
      %p51 = scmp.ne.s32.totalorder %s34, %s50
      %p52 = scmp.eq.s32.totalorder %s26, 0
      %p53 = por %p51, %p52
      %s54 = ssub.s32 %s20, %s27
      %p55 = scmp.eq.s32.totalorder %s54, 0
      %s57 = sadd.s32 %s56, 1
      %s58 = scalar_select %p55, %s56, %s57
      %p61 = pneg %p55
      %p62 = scmp.eq.s32.totalorder %s20, 1
      %p63 = por %p61, %p62
      %p64 = scmp.ne.s32.totalorder %s56, %s59
      %p65 = scmp.eq.s32.totalorder %s20, 0
      %p66 = por %p64, %p65
      %p67 = scmp.ne.s32.totalorder %s56, %s59
      %p68 = scmp.eq.s32.totalorder %s25, 1
      %p69 = por %p67, %p68
      %p70 = scmp.ne.s32.totalorder %s59, %s60
      %p71 = scmp.eq.s32.totalorder %s25, 0
      %p72 = por %p70, %p71
      %p73 = scmp.ne.s32.totalorder %s59, %s60
      %p74 = scmp.eq.s32.totalorder %s26, 1
      %p75 = por %p73, %p74
      %p77 = scmp.ne.s32.totalorder %s60, %s76
      %p78 = scmp.eq.s32.totalorder %s26, 0
      %p79 = por %p77, %p78
      %s80 = ssub.s32 %s20, %s27
      %p81 = scmp.eq.s32.totalorder %s80, 0
      %s83 = sadd.s32 %s82, 1
      %s84 = scalar_select %p81, %s82, %s83
      %p87 = pneg %p81
      %p88 = scmp.eq.s32.totalorder %s20, 1
      %p89 = por %p87, %p88
      %p90 = scmp.ne.s32.totalorder %s82, %s85
      %p91 = scmp.eq.s32.totalorder %s20, 0
      %p92 = por %p90, %p91
      %p93 = scmp.ne.s32.totalorder %s82, %s85
      %p94 = scmp.eq.s32.totalorder %s25, 1
      %p95 = por %p93, %p94
      %p96 = scmp.ne.s32.totalorder %s85, %s86
      %p97 = scmp.eq.s32.totalorder %s25, 0
      %p98 = por %p96, %p97
      %p99 = scmp.ne.s32.totalorder %s85, %s86
      %p100 = scmp.eq.s32.totalorder %s26, 1
      %p101 = por %p99, %p100
      %p103 = scmp.ne.s32.totalorder %s86, %s102
      %p104 = scmp.eq.s32.totalorder %s26, 0
      %p105 = por %p103, %p104
      %s107 = sadd.s32 %s106, 1
      %p110 = scmp.eq.s32.totalorder %s20, 1
      %p111 = scmp.ne.s32.totalorder %s106, %s108
      %p112 = scmp.eq.s32.totalorder %s20, 0
      %p113 = por %p111, %p112
      %p114 = scmp.ne.s32.totalorder %s106, %s108
      %p115 = scmp.eq.s32.totalorder %s25, 1
      %p116 = por %p114, %p115
      %p117 = scmp.ne.s32.totalorder %s108, %s109
      %p118 = scmp.eq.s32.totalorder %s25, 0
      %p119 = por %p117, %p118
      %p120 = scmp.ne.s32.totalorder %s108, %s109
      %p121 = scmp.eq.s32.totalorder %s26, 1
      %p122 = por %p120, %p121
      %p124 = scmp.ne.s32.totalorder %s109, %s123
      %p125 = scmp.eq.s32.totalorder %s26, 0
      %p126 = por %p124, %p125
      %s128 = sadd.s32 %s127, 1
      %p131 = scmp.eq.s32.totalorder %s20, 1
      %p132 = scmp.ne.s32.totalorder %s127, %s129
      %p133 = scmp.eq.s32.totalorder %s20, 0
      %p134 = por %p132, %p133
      %p135 = scmp.ne.s32.totalorder %s127, %s129
      %p136 = scmp.eq.s32.totalorder %s25, 1
      %p137 = por %p135, %p136
      %p138 = scmp.ne.s32.totalorder %s129, %s130
      %p139 = scmp.eq.s32.totalorder %s25, 0
      %p140 = por %p138, %p139
      %p141 = scmp.ne.s32.totalorder %s129, %s130
      %p142 = scmp.eq.s32.totalorder %s26, 1
      %p143 = por %p141, %p142
      %p145 = scmp.ne.s32.totalorder %s130, %s144
      %p146 = scmp.eq.s32.totalorder %s26, 0
      %p147 = por %p145, %p146
      %s149 = sadd.s32 %s148, 1
      %p152 = scmp.eq.s32.totalorder %s20, 1
      %p153 = scmp.ne.s32.totalorder %s148, %s150
      %p154 = scmp.eq.s32.totalorder %s20, 0
      %p155 = por %p153, %p154
      %p156 = scmp.ne.s32.totalorder %s148, %s150
      %p157 = scmp.eq.s32.totalorder %s25, 1
      %p158 = por %p156, %p157
      %p159 = scmp.ne.s32.totalorder %s150, %s151
      %p160 = scmp.eq.s32.totalorder %s25, 0
      %p161 = por %p159, %p160
      %p162 = scmp.ne.s32.totalorder %s150, %s151
      %p163 = scmp.eq.s32.totalorder %s26, 1
      %p164 = por %p162, %p163
      %p166 = scmp.ne.s32.totalorder %s151, %s165
      %p167 = scmp.eq.s32.totalorder %s26, 0
      %p168 = por %p166, %p167
      %s170 = sadd.s32 %s169, 1
      %p173 = scmp.eq.s32.totalorder %s20, 1
      %p174 = scmp.ne.s32.totalorder %s169, %s171
      %p175 = scmp.eq.s32.totalorder %s20, 0
      %p176 = por %p174, %p175
      %p177 = scmp.ne.s32.totalorder %s169, %s171
      %p178 = scmp.eq.s32.totalorder %s25, 1
      %p179 = por %p177, %p178
      %p180 = scmp.ne.s32.totalorder %s171, %s172
      %p181 = scmp.eq.s32.totalorder %s25, 0
      %p182 = por %p180, %p181
      %p183 = scmp.ne.s32.totalorder %s171, %s172
      %p184 = scmp.eq.s32.totalorder %s26, 1
      %p185 = por %p183, %p184
      %p187 = scmp.ne.s32.totalorder %s172, %s186
      %p188 = scmp.eq.s32.totalorder %s26, 0
      %p189 = por %p187, %p188
      %s190 = ssub.s32 %s20, %s27
      %p191 = scmp.eq.s32.totalorder %s190, 0
      %s193 = sadd.s32 %s192, 1
      %s194 = scalar_select %p191, %s192, %s193
      %p197 = pneg %p191
      %p198 = scmp.eq.s32.totalorder %s20, 1
      %p199 = por %p197, %p198
      %p200 = scmp.ne.s32.totalorder %s192, %s195
      %p201 = scmp.eq.s32.totalorder %s20, 0
      %p202 = por %p200, %p201
      %p203 = scmp.ne.s32.totalorder %s192, %s195
      %p204 = scmp.eq.s32.totalorder %s25, 1
      %p205 = por %p203, %p204
      %p206 = scmp.ne.s32.totalorder %s195, %s196
      %p207 = scmp.eq.s32.totalorder %s25, 0
      %p208 = por %p206, %p207
      %p209 = scmp.ne.s32.totalorder %s195, %s196
      %p210 = scmp.eq.s32.totalorder %s26, 1
      %p211 = por %p209, %p210
      %p213 = scmp.ne.s32.totalorder %s196, %s212
      %p214 = scmp.eq.s32.totalorder %s26, 0
      %p215 = por %p213, %p214
      %s216 = ssub.s32 %s20, %s27
      %p217 = scmp.eq.s32.totalorder %s216, 0
      %s219 = sadd.s32 %s218, 1
      %s220 = scalar_select %p217, %s218, %s219
      %p223 = pneg %p217
      %p224 = scmp.eq.s32.totalorder %s20, 1
      %p225 = por %p223, %p224
      %p226 = scmp.ne.s32.totalorder %s218, %s221
      %p227 = scmp.eq.s32.totalorder %s20, 0
      %p228 = por %p226, %p227
      %p229 = scmp.ne.s32.totalorder %s218, %s221
      %p230 = scmp.eq.s32.totalorder %s25, 1
      %p231 = por %p229, %p230
      %p232 = scmp.ne.s32.totalorder %s221, %s222
      %p233 = scmp.eq.s32.totalorder %s25, 0
      %p234 = por %p232, %p233
      %p235 = scmp.ne.s32.totalorder %s221, %s222
      %p236 = scmp.eq.s32.totalorder %s26, 1
      %p237 = por %p235, %p236
      %p239 = scmp.ne.s32.totalorder %s222, %s238
      %p240 = scmp.eq.s32.totalorder %s26, 0
      %p241 = por %p239, %p240
      %p242 = scmp.le.s32.totalorder 1, %s20
      %p243 = scmp.lt.s32.totalorder %s20, 3
      %p244 = pnand %p242, %p243
      %p245 = pneg %p244
      // Predicated region
      $region9: #{tpu_custom_call.1} parent=5 // pred_check
        _
      $region10: #{tpu_custom_call.1} parent=5 // pred_check_branch
        %247 = sbr.rel (%p244) target = $region12
      $region11: #{tpu_custom_call.1} parent=5 // pred_region
        %s248 = ssub.s32 %s20, 1
        // Predicated region
        $region13: #{tpu_custom_call.1} parent=11 // pred_check
          %p249 = pneg %p119
        $region14: #{tpu_custom_call.1} parent=11 // pred_check_branch
          %251 = sbr.rel (%p249) target = $region16
        $region15: #{tpu_custom_call.1} parent=11 // pred_region
          %s253 = ssub.s32 2048, 2048
          %254 = vsyncadd [#allocation3], %s253
          %s255 = sshll.u32 [#allocation2], 4
          %s256 = int_to_ptr.vmem [resolvable:$true] %s255
          %261 = dma.hbm_to_vmem [thread:$0]  %s3, 2048, %s256, [#allocation3], 128, 128, 8
        $region16: #{tpu_custom_call.1} parent=11 // pred_fallthru
          _
        // Predicated region
        $region17: #{tpu_custom_call.1} parent=11 // pred_check
          %p262 = pneg %p140
        $region18: #{tpu_custom_call.1} parent=11 // pred_check_branch
          %264 = sbr.rel (%p262) target = $region20
        $region19: #{tpu_custom_call.1} parent=11 // pred_region
          %s266 = ssub.s32 2048, 2048
          %267 = vsyncadd [#allocation6], %s266
          %s268 = sshll.u32 [#allocation5], 4
          %s269 = int_to_ptr.vmem [resolvable:$true] %s268
          %274 = dma.hbm_to_vmem [thread:$0]  %s4, 2048, %s269, [#allocation6], 128, 128, 8
        $region20: #{tpu_custom_call.1} parent=11 // pred_fallthru
          _
        // Predicated region
        $region21: #{tpu_custom_call.1} parent=11 // pred_check
          %p275 = pneg %p161
        $region22: #{tpu_custom_call.1} parent=11 // pred_check_branch
          %277 = sbr.rel (%p275) target = $region24
        $region23: #{tpu_custom_call.1} parent=11 // pred_region
          _
        $region24: #{tpu_custom_call.1} parent=11 // pred_fallthru
          _
        // Predicated region
        $region25: #{tpu_custom_call.1} parent=11 // pred_check
          %p278 = pneg %p182
        $region26: #{tpu_custom_call.1} parent=11 // pred_check_branch
          %280 = sbr.rel (%p278) target = $region28
        $region27: #{tpu_custom_call.1} parent=11 // pred_region
          _
        $region28: #{tpu_custom_call.1} parent=11 // pred_fallthru
          _
      $region12: #{tpu_custom_call.1} parent=5 // pred_fallthru
        _
      %p281 = scmp.lt.s32.totalorder %s20, 2
      // Predicated region
      $region29: #{tpu_custom_call.1} parent=5 // pred_check
        %p282 = pneg %p281
      $region30: #{tpu_custom_call.1} parent=5 // pred_check_branch
        %284 = sbr.rel (%p282) target = $region32
      $region31: #{tpu_custom_call.1} parent=5 // pred_region
        // Predicated region
        $region33: #{tpu_custom_call.1} parent=31 // pred_check
          %p285 = pneg %p40
        $region34: #{tpu_custom_call.1} parent=31 // pred_check_branch
          %287 = sbr.rel (%p285) target = $region36
        $region35: #{tpu_custom_call.1} parent=31 // pred_region
          %p288 = scmp.lt.s32.totalorder %s20, 1
          %s289 = scalar_select %p288, %s20, 1
          %s290 = smul.addr %s289, 8
          %s291 = scalar_lea.vmem %s0, %s290
        $region36: #{tpu_custom_call.1} parent=31 // pred_fallthru
          _
        // Predicated region
        $region37: #{tpu_custom_call.1} parent=31 // pred_check
          %p292 = pneg %p66
        $region38: #{tpu_custom_call.1} parent=31 // pred_check_branch
          %294 = sbr.rel (%p292) target = $region40
        $region39: #{tpu_custom_call.1} parent=31 // pred_region
          %p295 = scmp.lt.s32.totalorder %s20, 1
          %s296 = scalar_select %p295, %s20, 1
          %s297 = scalar_lea.vmem %s1, %s296
        $region40: #{tpu_custom_call.1} parent=31 // pred_fallthru
          _
        // Predicated region
        $region41: #{tpu_custom_call.1} parent=31 // pred_check
          %p298 = pneg %p92
        $region42: #{tpu_custom_call.1} parent=31 // pred_check_branch
          %300 = sbr.rel (%p298) target = $region44
        $region43: #{tpu_custom_call.1} parent=31 // pred_region
          %p301 = scmp.lt.s32.totalorder %s20, 1
          %s302 = scalar_select %p301, %s20, 1
          %s303 = smul.addr %s302, 8
          %s304 = scalar_lea.vmem %s2, %s303
        $region44: #{tpu_custom_call.1} parent=31 // pred_fallthru
          _
      $region32: #{tpu_custom_call.1} parent=5 // pred_fallthru
        _
      %p305 = scmp.le.s32.totalorder 1, %s20
      %p306 = scmp.lt.s32.totalorder %s20, 3
      %p307 = pnand %p305, %p306
      %p308 = pneg %p307
      // Predicated region
      $region45: #{tpu_custom_call.1} parent=5 // pred_check
        _
      $region46: #{tpu_custom_call.1} parent=5 // pred_check_branch
        %310 = sbr.rel (%p307) target = $region48
      $region47: #{tpu_custom_call.1} parent=5 // pred_region
        %s311 = ssub.s32 %s20, 1
        // Predicated region
        $region49: #{tpu_custom_call.1} parent=47 // pred_check
          %p312 = pneg %p119
        $region50: #{tpu_custom_call.1} parent=47 // pred_check_branch
          %314 = sbr.rel (%p312) target = $region52
        $region51: #{tpu_custom_call.1} parent=47 // pred_region
          %315 = dma.done [#allocation3], 2048
        $region52: #{tpu_custom_call.1} parent=47 // pred_fallthru
          _
        // Predicated region
        $region53: #{tpu_custom_call.1} parent=47 // pred_check
          %p316 = pneg %p140
        $region54: #{tpu_custom_call.1} parent=47 // pred_check_branch
          %318 = sbr.rel (%p316) target = $region56
        $region55: #{tpu_custom_call.1} parent=47 // pred_region
          %319 = dma.done [#allocation6], 2048
        $region56: #{tpu_custom_call.1} parent=47 // pred_fallthru
          _
        %p320 = scmp.lt.s32.totalorder %s25, 1
        %s321 = scalar_select %p320, %s25, 1
        %s322 = smul.addr %s321, 8
        %s323 = scalar_lea.vmem %s0, %s322
        %p324 = pneg %p46
        %p325 = pneg %p43
        %p326 = scmp.lt.s32.totalorder %s25, 1
        %s327 = scalar_select %p326, %s25, 1
        %s328 = scalar_lea.vmem %s1, %s327
        %p329 = pneg %p72
        %p330 = pneg %p69
        %p331 = scmp.lt.s32.totalorder %s25, 1
        %s332 = scalar_select %p331, %s25, 1
        %s333 = smul.addr %s332, 8
        %s334 = scalar_lea.vmem %s2, %s333
        %p335 = pneg %p98
        %p336 = pneg %p95
        %p337 = pneg %p119
        %p338 = pneg %p116
        %p339 = pneg %p140
        %p340 = pneg %p137
        %p341 = pneg %p161
        %p342 = pneg %p158
        %p343 = pneg %p182
        %p344 = pneg %p179
        %p345 = pneg %p208
        %p346 = pneg %p205
        %s347 = sand.u32 %s195, 1
        %s348 = scalar_lea.sflag [#allocation4], %s347
        %s349 = sand.u32 %s195, 1
        %s350 = scalar_lea.vmem [#allocation7], %s349
        %p351 = pneg %p234
        %p352 = pneg %p231
        %p353 = scmp.lt.s32.totalorder %s25, 1
        %s354 = scalar_select %p353, %s25, 1
        %s355 = smul.addr %s354, 8
        %s356 = scalar_lea.vmem %s8, %s355
        %p357 = scmp.lt.s32.totalorder %s25, 1
        %s358 = scalar_select %p357, %s25, 1
        %s359 = smul.addr %s358, 8
        %s360 = scalar_lea.vmem %s0, %s359
        %p361 = scmp.lt.s32.totalorder %s25, 1
        %s362 = scalar_select %p361, %s25, 1
        %s363 = scalar_lea.vmem %s1, %s362
        %p364 = scmp.lt.s32.totalorder %s25, 1
        %s365 = scalar_select %p364, %s25, 1
        %s366 = smul.addr %s365, 8
        %s367 = scalar_lea.vmem %s2, %s366
        %p368 = scmp.lt.s32.totalorder %s25, 1
        %s369 = scalar_select %p368, %s25, 1
        %s370 = smul.addr %s369, 8
        %s371 = scalar_lea.vmem %s8, %s370
        %v372 = vld [vmem:[%s360] sm:$0xff]
        %v373 = vld [vmem:[%s363] sm:$0x1]
        %v374 = vld [vmem:[#allocation2] sm:$0xff]
        %v375 = vld [vmem:[#allocation2 + $0x8] sm:$0xff]
        %v376 = vld [vmem:[#allocation2 + $0x10] sm:$0xff]
        %v377 = vld [vmem:[#allocation2 + $0x18] sm:$0xff]
        %v378 = vld [vmem:[#allocation2 + $0x20] sm:$0xff]
        %v379 = vld [vmem:[#allocation2 + $0x28] sm:$0xff]
        %v380 = vld [vmem:[#allocation2 + $0x30] sm:$0xff]
        %v381 = vld [vmem:[#allocation2 + $0x38] sm:$0xff]
        %v382 = vld [vmem:[#allocation2 + $0x40] sm:$0xff]
        %v383 = vld [vmem:[#allocation2 + $0x48] sm:$0xff]
        %v384 = vld [vmem:[#allocation2 + $0x50] sm:$0xff]
        %v385 = vld [vmem:[#allocation2 + $0x58] sm:$0xff]
        %v386 = vld [vmem:[#allocation2 + $0x60] sm:$0xff]
        %v387 = vld [vmem:[#allocation2 + $0x68] sm:$0xff]
        %v388 = vld [vmem:[#allocation2 + $0x70] sm:$0xff]
        %v389 = vld [vmem:[#allocation2 + $0x78] sm:$0xff]
        %v390 = vld [vmem:[#allocation5] sm:$0xff]
        %v391 = vld [vmem:[#allocation5 + $0x8] sm:$0xff]
        %v392 = vld [vmem:[#allocation5 + $0x10] sm:$0xff]
        %v393 = vld [vmem:[#allocation5 + $0x18] sm:$0xff]
        %v394 = vld [vmem:[#allocation5 + $0x20] sm:$0xff]
        %v395 = vld [vmem:[#allocation5 + $0x28] sm:$0xff]
        %v396 = vld [vmem:[#allocation5 + $0x30] sm:$0xff]
        %v397 = vld [vmem:[#allocation5 + $0x38] sm:$0xff]
        %v398 = vld [vmem:[#allocation5 + $0x40] sm:$0xff]
        %v399 = vld [vmem:[#allocation5 + $0x48] sm:$0xff]
        %v400 = vld [vmem:[#allocation5 + $0x50] sm:$0xff]
        %v401 = vld [vmem:[#allocation5 + $0x58] sm:$0xff]
        %v402 = vld [vmem:[#allocation5 + $0x60] sm:$0xff]
        %v403 = vld [vmem:[#allocation5 + $0x68] sm:$0xff]
        %v404 = vld [vmem:[#allocation5 + $0x70] sm:$0xff]
        %v405 = vld [vmem:[#allocation5 + $0x78] sm:$0xff]
        %v406 = vld [vmem:[%s5] sm:$0x1]
        %407 = vmatprep.subr.mxu0 0.0
        %408 = vmatpush1.msra.mxu0 %v405
        %409 = vmatprep.subr.mxu0 0.0
        %410 = vmatpush1.msra.mxu0 %v404
        %411 = vmatprep.subr.mxu0 0.0
        %412 = vmatpush1.msra.mxu0 %v403
        %413 = vmatprep.subr.mxu0 0.0
        %414 = vmatpush1.msra.mxu0 %v402
        %415 = vmatprep.subr.mxu0 0.0
        %416 = vmatpush1.msra.mxu0 %v401
        %417 = vmatprep.subr.mxu0 0.0
        %418 = vmatpush1.msra.mxu0 %v400
        %419 = vmatprep.subr.mxu0 0.0
        %420 = vmatpush1.msra.mxu0 %v399
        %421 = vmatprep.subr.mxu0 0.0
        %422 = vmatpush1.msra.mxu0 %v398
        %423 = vmatprep.subr.mxu0 0.0
        %424 = vmatpush1.msra.mxu0 %v397
        %425 = vmatprep.subr.mxu0 0.0
        %426 = vmatpush1.msra.mxu0 %v396
        %427 = vmatprep.subr.mxu0 0.0
        %428 = vmatpush1.msra.mxu0 %v395
        %429 = vmatprep.subr.mxu0 0.0
        %430 = vmatpush1.msra.mxu0 %v394
        %431 = vmatprep.subr.mxu0 0.0
        %432 = vmatpush1.msra.mxu0 %v393
        %433 = vmatprep.subr.mxu0 0.0
        %434 = vmatpush1.msra.mxu0 %v392
        %435 = vmatprep.subr.mxu0 0.0
        %436 = vmatpush1.msra.mxu0 %v391
        %437 = vmatprep.subr.mxu0 0.0
        %438 = vmatpush1.msra.mxu0 %v390
        %439 = vmatprep.subr.mxu0 0.0
        %440 = vmatpush2.msra.mxu0 0.0
        %441 = vmatprep.subr.mxu0 0.0
        %442 = vmatpush2.msra.mxu0 0.0
        %443 = vmatprep.subr.mxu0 0.0
        %444 = vmatpush2.msra.mxu0 0.0
        %445 = vmatprep.subr.mxu0 0.0
        %446 = vmatpush2.msra.mxu0 0.0
        %447 = vmatprep.subr.mxu0 0.0
        %448 = vmatpush2.msra.mxu0 0.0
        %449 = vmatprep.subr.mxu0 0.0
        %450 = vmatpush2.msra.mxu0 0.0
        %451 = vmatprep.subr.mxu0 0.0
        %452 = vmatpush2.msra.mxu0 0.0
        %453 = vmatprep.subr.mxu0 0.0
        %454 = vmatpush2.msra.mxu0 0.0
        %455 = vmatprep.subr.mxu0 0.0
        %456 = vmatpush2.msra.mxu0 0.0
        %457 = vmatprep.subr.mxu0 0.0
        %458 = vmatpush2.msra.mxu0 0.0
        %459 = vmatprep.subr.mxu0 0.0
        %460 = vmatpush2.msra.mxu0 0.0
        %461 = vmatprep.subr.mxu0 0.0
        %462 = vmatpush2.msra.mxu0 0.0
        %463 = vmatprep.subr.mxu0 0.0
        %464 = vmatpush2.msra.mxu0 0.0
        %465 = vmatprep.subr.mxu0 0.0
        %466 = vmatpush2.msra.mxu0 0.0
        %467 = vmatprep.subr.mxu0 0.0
        %468 = vmatpush2.msra.mxu0 0.0
        %469 = vmatprep.subr.mxu0 0.0
        %470 = vmatpush2.msra.mxu0 0.0
        %471 = vmatprep.mubr.f32.mxu0 0.0
        %472 = vmatmul.mubr.f32.gmra.mxu0 %v373
        %v473 = vpop.f32.mrf.mxu0
        %v474 = vadd.f32 %v406, %v473
        %v475 = vpop.f32.mrf.mxu0
        %476 = vdwg.mxu0
        %v477 = vlaneseq
        %v478 = vshrl.u32 %v477, 7
        %v479 = vsub.s32 0, %v478
        %v480 = vrot.slane %v474, %v479
        %481 = vmatprep.subr.mxu0 0.0
        %482 = vmatpush1.msra.mxu0 %v389
        %483 = vmatprep.subr.mxu0 0.0
        %484 = vmatpush1.msra.mxu0 %v388
        %485 = vmatprep.subr.mxu0 0.0
        %486 = vmatpush1.msra.mxu0 %v387
        %487 = vmatprep.subr.mxu0 0.0
        %488 = vmatpush1.msra.mxu0 %v386
        %489 = vmatprep.subr.mxu0 0.0
        %490 = vmatpush1.msra.mxu0 %v385
        %491 = vmatprep.subr.mxu0 0.0
        %492 = vmatpush1.msra.mxu0 %v384
        %493 = vmatprep.subr.mxu0 0.0
        %494 = vmatpush1.msra.mxu0 %v383
        %495 = vmatprep.subr.mxu0 0.0
        %496 = vmatpush1.msra.mxu0 %v382
        %497 = vmatprep.subr.mxu0 0.0
        %498 = vmatpush1.msra.mxu0 %v381
        %499 = vmatprep.subr.mxu0 0.0
        %500 = vmatpush1.msra.mxu0 %v380
        %501 = vmatprep.subr.mxu0 0.0
        %502 = vmatpush1.msra.mxu0 %v379
        %503 = vmatprep.subr.mxu0 0.0
        %504 = vmatpush1.msra.mxu0 %v378
        %505 = vmatprep.subr.mxu0 0.0
        %506 = vmatpush1.msra.mxu0 %v377
        %507 = vmatprep.subr.mxu0 0.0
        %508 = vmatpush1.msra.mxu0 %v376
        %509 = vmatprep.subr.mxu0 0.0
        %510 = vmatpush1.msra.mxu0 %v375
        %511 = vmatprep.subr.mxu0 0.0
        %512 = vmatpush1.msra.mxu0 %v374
        %513 = vmatprep.subr.mxu0 0.0
        %514 = vmatpush2.msra.mxu0 0.0
        %515 = vmatprep.subr.mxu0 0.0
        %516 = vmatpush2.msra.mxu0 0.0
        %517 = vmatprep.subr.mxu0 0.0
        %518 = vmatpush2.msra.mxu0 0.0
        %519 = vmatprep.subr.mxu0 0.0
        %520 = vmatpush2.msra.mxu0 0.0
        %521 = vmatprep.subr.mxu0 0.0
        %522 = vmatpush2.msra.mxu0 0.0
        %523 = vmatprep.subr.mxu0 0.0
        %524 = vmatpush2.msra.mxu0 0.0
        %525 = vmatprep.subr.mxu0 0.0
        %526 = vmatpush2.msra.mxu0 0.0
        %527 = vmatprep.subr.mxu0 0.0
        %528 = vmatpush2.msra.mxu0 0.0
        %529 = vmatprep.subr.mxu0 0.0
        %530 = vmatpush2.msra.mxu0 0.0
        %531 = vmatprep.subr.mxu0 0.0
        %532 = vmatpush2.msra.mxu0 0.0
        %533 = vmatprep.subr.mxu0 0.0
        %534 = vmatpush2.msra.mxu0 0.0
        %535 = vmatprep.subr.mxu0 0.0
        %536 = vmatpush2.msra.mxu0 0.0
        %537 = vmatprep.subr.mxu0 0.0
        %538 = vmatpush2.msra.mxu0 0.0
        %539 = vmatprep.subr.mxu0 0.0
        %540 = vmatpush2.msra.mxu0 0.0
        %541 = vmatprep.subr.mxu0 0.0
        %542 = vmatpush2.msra.mxu0 0.0
        %543 = vmatprep.subr.mxu0 0.0
        %544 = vmatpush2.msra.mxu0 0.0
        %545 = vmatprep.mubr.f32.mxu0 0.0
        %546 = vmatmul.mubr.f32.gmra.mxu0 %v372
        %v547 = vpop.f32.mrf.mxu0
        %v548 = vadd.f32 %v480, %v547
        %v549 = vpop.f32.mrf.mxu0
        %550 = vdwg.mxu0
        %v551 = vtanh.pop %v548
        %v552 = vld [vmem:[%s6] sm:$0x1]
        %v554 = vlaneseq
        %v555 = vshrl.u32 %v554, 7
        %v556 = vsub.s32 0, %v555
        %v557 = vrot.slane %v552, %v556
        %v559 = vmul.f32 %v551, %v557
        %560 = vadd.xlane.f32.xlu0 %v559
        %v561 = vpop.xlane.xlu0 %560
        %v562 = vrot.slane %v561, 4
        %v563 = vmax.f32 %v561, %v562
        %v564 = vrot.slane %v563, 2
        %v565 = vmax.f32 %v563, %v564
        %v566 = vrot.slane %v565, 1
        %v567 = vmax.f32 %v565, %v566
        %v568 = vsub.f32 %v561, %v567
        %v569 = vmul.f32 %v568, 1.442695
        %v570 = vpow.pop %v569
        %v571 = vrot.slane %v570, 4
        %v572 = vadd.f32 %v570, %v571
        %v573 = vrot.slane %v572, 2
        %v574 = vadd.f32 %v572, %v573
        %v575 = vrot.slane %v574, 1
        %v576 = vadd.f32 %v574, %v575
        %v577 = vrcp.pop %v576
        %v578 = vmul.f32 %v570, %v577
        %v579 = vld [vmem:[%s367] sm:$0xff]
        %v580 = vmul.f32 %v578, %v579
        %vm581 = vcmask 7168
        %v582 = vsel %vm581, %v580, 0.0
        %v583 = vrot.slane %v582, 4
        %v584 = vadd.f32 %v582, %v583
        %v585 = vrot.slane %v584, 2
        %v586 = vadd.f32 %v584, %v585
        %v587 = vrot.slane %v586, 1
        %v588 = vadd.f32 %v586, %v587
        %v589 = vrcp.pop %v588
        %v590 = vmul.f32 %v580, %v589
        %592 = vset.pattern.permute.xlu0 0
        %593 = vperm.xlu0 %592, %v590
        %v594 = vpop.permute.xlu0 %593
        %v596 = vmul.f32 %v594, %v372
        %v597 = vrot.slane %v596, 4
        %v598 = vadd.f32 %v596, %v597
        %v599 = vrot.slane %v598, 2
        %v600 = vadd.f32 %v598, %v599
        %v601 = vrot.slane %v600, 1
        %v602 = vadd.f32 %v600, %v601
        %603 = vst [vmem:[%s350] sm:$0x1] %v602
        %604 = vst.msk [vmem:[%s371] sm:$0xff] %vm581, %v590
        %s605 = sand.u32 %s195, 1
        %s606 = scalar_lea.sflag [#allocation4], %s605
        %s607 = sand.u32 %s195, 1
        %s608 = scalar_lea.vmem [#allocation7], %s607
        %p609 = scmp.lt.s32.totalorder %s25, 1
        %s610 = scalar_select %p609, %s25, 1
        %s611 = smul.addr %s610, 8
        %s612 = scalar_lea.vmem %s8, %s611
        // Predicated region
        $region57: #{tpu_custom_call.1} parent=47 // pred_check
          %p613 = pneg %p205
        $region58: #{tpu_custom_call.1} parent=47 // pred_check_branch
          %615 = sbr.rel (%p613) target = $region60
        $region59: #{tpu_custom_call.1} parent=47 // pred_region
          %s617 = ssub.s32 16, 16
          %618 = vsyncadd %s606, %s617
          %s619 = smul.addr %s25, 16
          %s620 = scalar_lea.hbm %s7, %s619
          %s622 = sshll.u32 %s608, 4
          %s623 = int_to_ptr.vmem [resolvable:$true] %s622
          %625 = dma.vmem_to_hbm [thread:$0]  %s623, 16, %s620, %s606
        $region60: #{tpu_custom_call.1} parent=47 // pred_fallthru
          _
        // Predicated region
        $region61: #{tpu_custom_call.1} parent=47 // pred_check
          %p626 = pneg %p231
        $region62: #{tpu_custom_call.1} parent=47 // pred_check_branch
          %628 = sbr.rel (%p626) target = $region64
        $region63: #{tpu_custom_call.1} parent=47 // pred_region
          _
        $region64: #{tpu_custom_call.1} parent=47 // pred_fallthru
          _
      $region48: #{tpu_custom_call.1} parent=5 // pred_fallthru
        _
      %p629 = scmp.le.s32.totalorder 2, %s20
      // Predicated region
      $region65: #{tpu_custom_call.1} parent=5 // pred_check
        %p630 = pneg %p629
      $region66: #{tpu_custom_call.1} parent=5 // pred_check_branch
        %632 = sbr.rel (%p630) target = $region68
      $region67: #{tpu_custom_call.1} parent=5 // pred_region
        %s633 = ssub.s32 %s20, 2
        // Predicated region
        $region69: #{tpu_custom_call.1} parent=67 // pred_check
          %p634 = pneg %p211
        $region70: #{tpu_custom_call.1} parent=67 // pred_check_branch
          %636 = sbr.rel (%p634) target = $region72
        $region71: #{tpu_custom_call.1} parent=67 // pred_region
          %s637 = sand.u32 %s196, 1
          %s638 = scalar_lea.sflag [#allocation4], %s637
          %s639 = sand.u32 %s196, 1
          %s640 = scalar_lea.vmem [#allocation7], %s639
          %641 = dma.done %s638, 16
        $region72: #{tpu_custom_call.1} parent=67 // pred_fallthru
          _
        // Predicated region
        $region73: #{tpu_custom_call.1} parent=67 // pred_check
          %p642 = pneg %p237
        $region74: #{tpu_custom_call.1} parent=67 // pred_check_branch
          %644 = sbr.rel (%p642) target = $region76
        $region75: #{tpu_custom_call.1} parent=67 // pred_region
          %p645 = scmp.lt.s32.totalorder %s26, 1
          %s646 = scalar_select %p645, %s26, 1
          %s647 = smul.addr %s646, 8
          %s648 = scalar_lea.vmem %s8, %s647
        $region76: #{tpu_custom_call.1} parent=67 // pred_fallthru
          _
      $region68: #{tpu_custom_call.1} parent=5 // pred_fallthru
        _
    $region6: #{tpu_custom_call.1} parent=1 // loop_footer
      %s24 = sadd.s32 1, %s20
    $region7: #{tpu_custom_call.1} parent=1 // loop_footer_branch
      %19 = sbr.rel target = $region3
    $region8: #{tpu_custom_call.1} parent=1 // loop_exit
      _
    %649 = vsyncpa [#allocation3], 1
    %s650 = scalar_lea.sflag [#allocation3], 1
    %651 = vsyncpa %s650, 1
    %652 = vsyncpa [#allocation6], 1
    %653 = vsyncpa [#allocation4], 1
    %s654 = scalar_lea.sflag [#allocation4], 1
    %655 = vsyncpa %s654, 1

</llo_original>
